<compile_context>
chip_gen: v5e
topology: v5e:2x2
jax: 0.10.0
libtpu: 0.0.40
codegen_flags: <defaults>
</compile_context>

<pallas_src>
import functools

import jax
import jax.numpy as jnp
from jax.experimental import pallas as pl
from jax.experimental.pallas import tpu as pltpu

F_X, F_C, F_R = 3, 2, 3          # in_features, context_features, root_features
HIDDEN, F_OUT = 10, 3            # hidden_features, out_features
HP = 128                         # lane-padded width used for hidden/out columns
F_TOT = F_X + F_C + F_R          # 8
F_AUG = F_TOT + 3                # + one bias-indicator column per node type
F_AUG_P = ((F_AUG + 7) // 8) * 8 # sublane-aligned contraction dim (16)

# f32 is exact vs the reference; set to jnp.bfloat16 on v6e/v7x for the native
# MXU path (halves a_big DMA bytes; loosen the allclose tolerance if you do).
MATMUL_DTYPE = jnp.float32


def _round_up(n, m):
    return ((n + m - 1) // m) * m


def _full_spec(shape):
    nd = len(shape)
    return pl.BlockSpec(shape, lambda i, _nd=nd: (0,) * _nd)


def pack_params(params):
    """Pack all 7 Linear layers into two lane-aligned slabs.  Call ONCE per
    parameter set (these slabs do not depend on node features or edges)."""
    # w_pack columns [0:HP)   = "self" half  (Lin_x / Lin_c / Lin_r)
    #        columns [HP:2HP) = "message" half (Lin_xx / Lin_cx / Lin_rx)
    w_pack = jnp.zeros((F_AUG_P, 2 * HP), jnp.float32)
    w_pack = w_pack.at[0:F_X, 0:HIDDEN].set(params["w_x"])
    w_pack = w_pack.at[F_X:F_X + F_C, 0:HIDDEN].set(params["w_c"])
    w_pack = w_pack.at[F_X + F_C:F_TOT, 0:HIDDEN].set(params["w_r"])
    w_pack = w_pack.at[0:F_X, HP:HP + HIDDEN].set(params["w_xx"])
    w_pack = w_pack.at[F_X:F_X + F_C, HP:HP + HIDDEN].set(params["w_cx"])
    w_pack = w_pack.at[F_X + F_C:F_TOT, HP:HP + HIDDEN].set(params["w_rx"])
    # biases enter via the per-type "ones" indicator rows
    w_pack = w_pack.at[F_TOT + 0, 0:HIDDEN].set(params["b_x"][0])
    w_pack = w_pack.at[F_TOT + 1, 0:HIDDEN].set(params["b_c"][0])
    w_pack = w_pack.at[F_TOT + 2, 0:HIDDEN].set(params["b_r"][0])
    w_pack = w_pack.at[F_TOT + 0, HP:HP + HIDDEN].set(params["b_xx"][0])
    w_pack = w_pack.at[F_TOT + 1, HP:HP + HIDDEN].set(params["b_cx"][0])
    w_pack = w_pack.at[F_TOT + 2, HP:HP + HIDDEN].set(params["b_rx"][0])
    # Pool-bias fold: x-type rows carry a 1.0 at self-half column HIDDEN
    # (survives ReLU; the message half is zero in that column so A@msg does
    # not disturb it), and pool_pack row HIDDEN holds b_pool.
    w_pack = w_pack.at[F_TOT + 0, HIDDEN].set(1.0)

    pool_pack = jnp.zeros((HP, HP), jnp.float32)
    pool_pack = pool_pack.at[0:HIDDEN, 0:F_OUT].set(params["w_pool"])
    pool_pack = pool_pack.at[HIDDEN, 0:F_OUT].set(params["b_pool"][0])
    return w_pack, pool_pack


def _kernel(nx_p, tail, s_ref, a_ref, w_ref, p_ref, out_ref):
    # One fused matmul for all 6 relation Linears (+biases via ones columns).
    h = jnp.dot(s_ref[...], w_ref[...], preferred_element_type=jnp.float32)
    h = jnp.maximum(h, 0.0)                       # (nt_p, 2*HP), f32
    self_and_cr = h[:, :HP]                       # self_x / c_out / r_out
    msg = h[:, HP:]                               # per-source-node messages
    # scatter-add over edges == adjacency-count matmul (exactly equivalent)
    agg = self_and_cr[0:nx_p, :] + jnp.dot(
        a_ref[...], msg, preferred_element_type=jnp.float32)          # (nx_p, HP)
    # pool matmul; bias is folded in via agg's ones column @ pool row HIDDEN
    x_rows = jnp.dot(agg, p_ref[...], preferred_element_type=jnp.float32)
    # lane-dense (128-wide), sublane-aligned stores into the single output slab
    out_ref[pl.ds(0, nx_p), :] = x_rows
    out_ref[pl.ds(nx_p, tail), :] = self_and_cr[nx_p:, :]


@jax.jit
def _forward_impl(w_pack, pool_pack, x, c, r, edge_index_dict):
    nx, nc, nr = x.shape[0], c.shape[0], r.shape[0]
    nx_p = _round_up(max(nx, 1), 8)          # keep the x block sublane-aligned
    nt = nx_p + nc + nr
    nt_p = _round_up(nt, 8)
    tail = nt_p - nx_p                        # 8-aligned c/r tail rows

    # ---- adjacency-count matrix, canonicalized exactly like CondGCN.message ----
    # Source columns laid out as: x:[0,nx), c:[nx_p, nx_p+nc), r:[nx_p+nc, ...).
    col_off = {"x": 0, "c": nx_p, "r": nx_p + nc}
    a_big = jnp.zeros((nx_p, nt_p), jnp.float32)
    for key, (src, dst) in edge_index_dict.items():
        src_name, direction, dst_name = key
        layer = "".join(key)
        if direction == "<-":
            # NOTE: mirrors the PyTorch model (forces the 'x->x' layer); this is
            # a latent bug in the reference for non-x '<-' edges, reproduced here.
            src_name, dst_name = dst_name, src_name
            src, dst = dst, src
            layer = "x->x"
        if dst_name != "x":
            continue
        a_big = a_big.at[
            dst.astype(jnp.int32),
            col_off[layer[0]] + src.astype(jnp.int32)].add(1.0)
    # missing edge types simply stay all-zero (no crash on absent relations)

    # ---- block-diagonal node-feature slab with per-type bias "ones" columns ----
    s_pack = jnp.zeros((nt_p, F_AUG_P), jnp.float32)
    s_pack = s_pack.at[0:nx, 0:F_X].set(x)
    s_pack = s_pack.at[nx_p:nx_p + nc, F_X:F_X + F_C].set(c)
    s_pack = s_pack.at[nx_p + nc:nx_p + nc + nr, F_X + F_C:F_TOT].set(r)
    s_pack = s_pack.at[0:nx, F_TOT + 0].set(1.0)
    s_pack = s_pack.at[nx_p:nx_p + nc, F_TOT + 1].set(1.0)
    s_pack = s_pack.at[nx_p + nc:nx_p + nc + nr, F_TOT + 2].set(1.0)

    kernel = functools.partial(_kernel, nx_p, tail)

    flops = (2 * nt_p * F_AUG_P * (2 * HP)      # fused relation matmul
             + 2 * nx_p * nt_p * HP             # adjacency matmul
             + 2 * nx_p * HP * HP)              # pool matmul
    bytes_accessed = 4 * (s_pack.size + a_big.size + w_pack.size
                          + pool_pack.size + nt_p * HP)

    out = pl.pallas_call(
        kernel,
        out_shape=jax.ShapeDtypeStruct((nt_p, HP), jnp.float32),
        grid=(1,),
        in_specs=[_full_spec((nt_p, F_AUG_P)), _full_spec((nx_p, nt_p)),
                  _full_spec((F_AUG_P, 2 * HP)), _full_spec((HP, HP))],
        out_specs=_full_spec((nt_p, HP)),
        compiler_params=pltpu.CompilerParams(
            dimension_semantics=("arbitrary",),
            vmem_limit_bytes=32 * 1024 * 1024),
        cost_estimate=pl.CostEstimate(
            flops=flops, transcendentals=0, bytes_accessed=bytes_accessed),
    )(s_pack.astype(MATMUL_DTYPE), a_big.astype(MATMUL_DTYPE),
      w_pack.astype(MATMUL_DTYPE), pool_pack.astype(MATMUL_DTYPE))

    x_out = out[0:nx, 0:F_OUT]
    c_out = out[nx_p:nx_p + nc, 0:HIDDEN]
    r_out = out[nx_p + nc:nx_p + nc + nr, 0:HIDDEN]
    return x_out, c_out, r_out


def cond_gcn_forward(w_pack, pool_pack, x_dict, edge_index_dict):
    """Mirror of CondGCN.forward: returns (new x_dict, edge_index_dict)."""
    x_out, c_out, r_out = _forward_impl(
        w_pack, pool_pack, x_dict["x"], x_dict["c"], x_dict["r"],
        edge_index_dict)
    new_x_dict = dict(x_dict)
    new_x_dict["x"], new_x_dict["c"], new_x_dict["r"] = x_out, c_out, r_out
    return new_x_dict, edge_index_dict


def init_params(key):
    """Deterministic parameter init, PyTorch-Linear-style uniform(-1/sqrt(fan_in), ...)."""
    params = {}
    specs = {
        "x": (F_X, HIDDEN), "c": (F_C, HIDDEN), "r": (F_R, HIDDEN),
        "xx": (F_X, HIDDEN), "cx": (F_C, HIDDEN), "rx": (F_R, HIDDEN),
        "pool": (HIDDEN, F_OUT),
    }
    for name, (fin, fout) in specs.items():
        key, kw, kb = jax.random.split(key, 3)
        bound = 1.0 / (fin ** 0.5)
        params[f"w_{name}"] = jax.random.uniform(
            kw, (fin, fout), jnp.float32, -bound, bound)
        params[f"b_{name}"] = jax.random.uniform(
            kb, (1, fout), jnp.float32, -bound, bound)
    return params


def reference_forward(params, x_dict, edge_index_dict):
    """Pure-JAX reference mirroring CondGCN.forward (aggr='add', no attention)."""
    relu = lambda v: jnp.maximum(v, 0.0)
    x, c, r = x_dict["x"], x_dict["c"], x_dict["r"]
    self_x = relu(x @ params["w_x"] + params["b_x"])
    agg = self_x
    wmap = {"x->x": ("w_xx", "b_xx", x),
            "c->x": ("w_cx", "b_cx", c),
            "r->x": ("w_rx", "b_rx", r)}
    for key, (src, dst) in edge_index_dict.items():
        src_name, direction, dst_name = key
        layer_name = "".join(key)
        if direction == "<-":
            src, dst = dst, src
            layer_name = "x->x"
            src_name, dst_name = dst_name, src_name
        if dst_name != "x":
            continue
        wn, bn, feats = wmap[layer_name]
        msg = relu(feats[src] @ params[wn] + params[bn])
        agg = agg.at[dst].add(msg)
    x_out = agg @ params["w_pool"] + params["b_pool"]
    c_out = relu(c @ params["w_c"] + params["b_c"])
    r_out = relu(r @ params["w_r"] + params["b_r"])
    return x_out, c_out, r_out


if __name__ == "__main__":
    key = jax.random.PRNGKey(0)
    key, kx, kc, kr = jax.random.split(key, 4)

    Nx, Nc, Nr = 8, 4, 1
    x = jax.random.normal(kx, (Nx, F_X), jnp.float32)
    c = jax.random.normal(kc, (Nc, F_C), jnp.float32)
    r = jax.random.normal(kr, (Nr, F_R), jnp.float32)
    x_dict = {"x": x, "c": c, "r": r}

    edge_index_dict = {
        ("x", "->", "x"): (jnp.arange(8, dtype=jnp.int32),
                           jnp.array([1, 2, 3, 4, 5, 6, 7, 0], jnp.int32)),
        ("c", "->", "x"): (jnp.array([0, 1, 2, 3, 0, 1, 2, 3], jnp.int32),
                           jnp.arange(8, dtype=jnp.int32)),
        ("r", "->", "x"): (jnp.zeros((8,), jnp.int32),
                           jnp.arange(8, dtype=jnp.int32)),
    }

    params = init_params(key)
    # Parameter slabs are packed once per parameter set (hoisted out of the
    # per-call path per the perf review).
    w_pack, pool_pack = pack_params(params)

    out_dict, _ = cond_gcn_forward(w_pack, pool_pack, x_dict, edge_index_dict)
    jax.block_until_ready(out_dict["x"])

    # correctness check against a pure-JAX reference of the PyTorch semantics
    x_ref, c_ref, r_ref = reference_forward(params, x_dict, edge_index_dict)
    assert jnp.allclose(out_dict["x"], x_ref, rtol=1e-5, atol=1e-5)
    assert jnp.allclose(out_dict["c"], c_ref, rtol=1e-5, atol=1e-5)
    assert jnp.allclose(out_dict["r"], r_ref, rtol=1e-5, atol=1e-5)

    print("KERNEL_OK")
</pallas_src>

<mosaic_0001>
module attributes {stable_mosaic.version = 11 : i64} {
  func.func @_kernel(%arg0: i32, %arg1: memref<16x16xf32, #tpu.memory_space<vmem>>, %arg2: memref<8x16xf32, #tpu.memory_space<vmem>>, %arg3: memref<16x256xf32, #tpu.memory_space<vmem>>, %arg4: memref<128x128xf32, #tpu.memory_space<vmem>>, %arg5: memref<16x128xf32, #tpu.memory_space<vmem>>) attributes {dimension_semantics = [#tpu.dimension_semantics<arbitrary>], iteration_bounds = array<i64: 1>, scalar_prefetch = 0 : i64, scratch_operands = 0 : i64, tpu.core_type = #tpu.core_type<tc>, window_params = [{pipeline_mode = #tpu.pipeline_mode<synchronous>, transform_indices = @transform_0, window_bounds = array<i64: 16, 16>}, {pipeline_mode = #tpu.pipeline_mode<synchronous>, transform_indices = @transform_1, window_bounds = array<i64: 8, 16>}, {pipeline_mode = #tpu.pipeline_mode<synchronous>, transform_indices = @transform_2, window_bounds = array<i64: 16, 256>}, {pipeline_mode = #tpu.pipeline_mode<synchronous>, transform_indices = @transform_3, window_bounds = array<i64: 128, 128>}, {pipeline_mode = #tpu.pipeline_mode<synchronous>, transform_indices = @transform_4, window_bounds = array<i64: 16, 128>}]} {
    %c0 = arith.constant 0 : index
    %c0_0 = arith.constant 0 : index
    %0 = vector.load %arg1[%c0, %c0_0] : memref<16x16xf32, #tpu.memory_space<vmem>>, vector<16x16xf32>
    %c0_1 = arith.constant 0 : index
    %c0_2 = arith.constant 0 : index
    %1 = vector.load %arg3[%c0_1, %c0_2] : memref<16x256xf32, #tpu.memory_space<vmem>>, vector<16x256xf32>
    %cst = arith.constant dense<0.000000e+00> : vector<16x256xf32>
    %2 = tpu.matmul %0, %1, %cst {dimension_numbers = #tpu.dot_dimension_numbers<[1], [0], [0], [1], [0, 0, 1, 1], [], []>} : vector<16x16xf32>, vector<16x256xf32>, vector<16x256xf32> -> vector<16x256xf32>
    %cst_3 = arith.constant 0.000000e+00 : f32
    %3 = vector.broadcast %cst_3 : f32 to vector<16x256xf32>
    %4 = arith.maximumf %2, %3 : vector<16x256xf32>
    %5 = vector.extract_strided_slice %4 {offsets = [0, 0], sizes = [16, 128], strides = [1, 1]} : vector<16x256xf32> to vector<16x128xf32>
    %6 = vector.extract_strided_slice %4 {offsets = [0, 128], sizes = [16, 128], strides = [1, 1]} : vector<16x256xf32> to vector<16x128xf32>
    %7 = vector.extract_strided_slice %5 {offsets = [0, 0], sizes = [8, 128], strides = [1, 1]} : vector<16x128xf32> to vector<8x128xf32>
    %c0_4 = arith.constant 0 : index
    %c0_5 = arith.constant 0 : index
    %8 = vector.load %arg2[%c0_4, %c0_5] : memref<8x16xf32, #tpu.memory_space<vmem>>, vector<8x16xf32>
    %cst_6 = arith.constant dense<0.000000e+00> : vector<8x128xf32>
    %9 = tpu.matmul %8, %6, %cst_6 {dimension_numbers = #tpu.dot_dimension_numbers<[1], [0], [0], [1], [0, 0, 1, 1], [], []>} : vector<8x16xf32>, vector<16x128xf32>, vector<8x128xf32> -> vector<8x128xf32>
    %10 = arith.addf %7, %9 : vector<8x128xf32>
    %c0_7 = arith.constant 0 : index
    %c0_8 = arith.constant 0 : index
    %11 = vector.load %arg4[%c0_7, %c0_8] : memref<128x128xf32, #tpu.memory_space<vmem>>, vector<128x128xf32>
    %cst_9 = arith.constant dense<0.000000e+00> : vector<8x128xf32>
    %12 = tpu.matmul %10, %11, %cst_9 {dimension_numbers = #tpu.dot_dimension_numbers<[1], [0], [0], [1], [0, 0, 1, 1], [], []>} : vector<8x128xf32>, vector<128x128xf32>, vector<8x128xf32> -> vector<8x128xf32>
    %c0_10 = arith.constant 0 : index
    %c0_11 = arith.constant 0 : index
    %13 = vector.load %arg5[%c0_10, %c0_11] : memref<16x128xf32, #tpu.memory_space<vmem>>, vector<8x128xf32>
    tpu.vector_store %arg5[%c0_10, %c0_11], %12 {strides = array<i32>} : memref<16x128xf32, #tpu.memory_space<vmem>>, vector<8x128xf32>,
    %14 = vector.extract_strided_slice %5 {offsets = [8, 0], sizes = [8, 128], strides = [1, 1]} : vector<16x128xf32> to vector<8x128xf32>
    %c8 = arith.constant 8 : index
    %c0_12 = arith.constant 0 : index
    %15 = vector.load %arg5[%c8, %c0_12] : memref<16x128xf32, #tpu.memory_space<vmem>>, vector<8x128xf32>
    tpu.vector_store %arg5[%c8, %c0_12], %14 {strides = array<i32>} : memref<16x128xf32, #tpu.memory_space<vmem>>, vector<8x128xf32>,
    return
  }
  func.func @transform_0(%arg0: i32) -> (i32, i32) {
    %c0_i32 = arith.constant 0 : i32
    %c0_i32_0 = arith.constant 0 : i32
    %c0_i32_1 = arith.constant 0 : i32
    return %c0_i32, %c0_i32_0 : i32, i32
  }
  func.func @transform_1(%arg0: i32) -> (i32, i32) {
    %c0_i32 = arith.constant 0 : i32
    %c0_i32_0 = arith.constant 0 : i32
    %c0_i32_1 = arith.constant 0 : i32
    return %c0_i32, %c0_i32_0 : i32, i32
  }
  func.func @transform_2(%arg0: i32) -> (i32, i32) {
    %c0_i32 = arith.constant 0 : i32
    %c0_i32_0 = arith.constant 0 : i32
    %c0_i32_1 = arith.constant 0 : i32
    return %c0_i32, %c0_i32_0 : i32, i32
  }
  func.func @transform_3(%arg0: i32) -> (i32, i32) {
    %c0_i32 = arith.constant 0 : i32
    %c0_i32_0 = arith.constant 0 : i32
    %c0_i32_1 = arith.constant 0 : i32
    return %c0_i32, %c0_i32_0 : i32, i32
  }
  func.func @transform_4(%arg0: i32) -> (i32, i32) {
    %c0_i32 = arith.constant 0 : i32
    %c0_i32_0 = arith.constant 0 : i32
    %c0_i32_1 = arith.constant 0 : i32
    return %c0_i32, %c0_i32_0 : i32, i32
  }
}

</mosaic_0001>

<llo_original>
// kernel: _forward_impl.1
$region0: #{_forward_impl.1}
  #allocation0 [shape = 'u32[]', space=smem, size = 0x4, offset = 0x4, fixed_abs, tag = 'smem constant byte address 0x4 - core index']
  #allocation1 [shape = 'u32[72,128]{1,0:T(1,128)}', space=vmem, size = 0x9000, scoped, tag = 'internal scratch']
  %s0 = inlined_call_operand.vmem [shape: f32[16,16], index: 0, kind: input, shape index: {}]
  %s1 = inlined_call_operand.vmem [shape: f32[8,16], index: 1, kind: input, shape index: {}]
  %s2 = inlined_call_operand.vmem [shape: f32[16,256], index: 2, kind: input, shape index: {}]
  %s3 = inlined_call_operand.vmem [shape: f32[128,128], index: 3, kind: input, shape index: {}]
  %s4 = inlined_call_operand.vmem [shape: f32[16,128], index: 4, kind: output, shape index: {}]
  %s5 = sld [smem:[#allocation0]]
  $region26: #{_forward_impl.1} parent=0
    _
  %s7 = ssub.s32 1, %s5
  %s8 = scalar_select 0, %s7, %s5
  // Predicated region
  $region2: #{_forward_impl.1} parent=0 // pred_check
    _
  $region3: #{_forward_impl.1} parent=0 // pred_check_branch
    %10 = sbr.rel (0) target = $region5
  $region4: #{_forward_impl.1} parent=0 // pred_region
    _
  $region5: #{_forward_impl.1} parent=0 // pred_fallthru
    _
  // Predicated region
  $region6: #{_forward_impl.1} parent=0 // pred_check
    _
  $region7: #{_forward_impl.1} parent=0 // pred_check_branch
    %12 = sbr.rel (0) target = $region9
  $region8: #{_forward_impl.1} parent=0 // pred_region
    _
  $region9: #{_forward_impl.1} parent=0 // pred_fallthru
    _
  // Predicated region
  $region10: #{_forward_impl.1} parent=0 // pred_check
    _
  $region11: #{_forward_impl.1} parent=0 // pred_check_branch
    %14 = sbr.rel (0) target = $region13
  $region12: #{_forward_impl.1} parent=0 // pred_region
    _
  $region13: #{_forward_impl.1} parent=0 // pred_fallthru
    _
  // Predicated region
  $region14: #{_forward_impl.1} parent=0 // pred_check
    _
  $region15: #{_forward_impl.1} parent=0 // pred_check_branch
    %16 = sbr.rel (0) target = $region17
  $region16: #{_forward_impl.1} parent=0 // pred_region
    _
  $region17: #{_forward_impl.1} parent=0 // pred_fallthru
    _
  %v17 = vld [vmem:[%s0] sm:$0xff]
  %v18 = vld [vmem:[%s0 + $0x8] sm:$0xff]
  %v19 = vld [vmem:[%s2] sm:$0xff]
  %v20 = vld [vmem:[%s2 + $0x8] sm:$0xff]
  %v21 = vld [vmem:[%s2 + $0x10] sm:$0xff]
  %v22 = vld [vmem:[%s2 + $0x18] sm:$0xff]
  %vm23 = vcmask 130048
  %v25 = vsel %vm23, %v17, 0
  %v28 = vsel %vm23, %v18, 0
  %30 = vmatpush.msra.mxu0 0.0
  %31 = vmatpush.msra.mxu0 0.0
  %32 = vmatpush.msra.mxu0 0.0
  %33 = vmatpush.msra.mxu0 0.0
  %34 = vmatpush.msra.mxu0 0.0
  %35 = vmatpush.msra.mxu0 0.0
  %36 = vmatpush.msra.mxu0 0.0
  %37 = vmatpush.msra.mxu0 0.0
  %38 = vmatpush.msra.mxu0 0.0
  %39 = vmatpush.msra.mxu0 0.0
  %40 = vmatpush.msra.mxu0 0.0
  %41 = vmatpush.msra.mxu0 0.0
  %42 = vmatpush.msra.mxu0 0.0
  %43 = vmatpush.msra.mxu0 0.0
  %44 = vmatpush.msra.mxu0 %v21
  %45 = vmatpush.msra.mxu0 %v19
  %46 = vmatmul.f32.gmra.mxu0 %v25
  %v47 = vpop.f32.mrf.mxu0
  %v48 = vadd.f32 0.0, %v47
  %49 = vmatmul.f32.gmra.mxu0 %v28
  %v50 = vpop.f32.mrf.mxu0
  %v51 = vadd.f32 0.0, %v50
  %52 = vdwg.mxu0
  %53 = vmatpush.msra.mxu0 0.0
  %54 = vmatpush.msra.mxu0 0.0
  %55 = vmatpush.msra.mxu0 0.0
  %56 = vmatpush.msra.mxu0 0.0
  %57 = vmatpush.msra.mxu0 0.0
  %58 = vmatpush.msra.mxu0 0.0
  %59 = vmatpush.msra.mxu0 0.0
  %60 = vmatpush.msra.mxu0 0.0
  %61 = vmatpush.msra.mxu0 0.0
  %62 = vmatpush.msra.mxu0 0.0
  %63 = vmatpush.msra.mxu0 0.0
  %64 = vmatpush.msra.mxu0 0.0
  %65 = vmatpush.msra.mxu0 0.0
  %66 = vmatpush.msra.mxu0 0.0
  %67 = vmatpush.msra.mxu0 %v22
  %68 = vmatpush.msra.mxu0 %v20
  %69 = vmatmul.f32.gmra.mxu0 %v25
  %v70 = vpop.f32.mrf.mxu0
  %v71 = vadd.f32 0.0, %v70
  %72 = vmatmul.f32.gmra.mxu0 %v28
  %v73 = vpop.f32.mrf.mxu0
  %v74 = vadd.f32 0.0, %v73
  %75 = vdwg.mxu0
  %v76 = vmax.f32 %v48, 0.0
  %v77 = vmax.f32 %v71, 0.0
  %v78 = vmax.f32 %v51, 0.0
  %v79 = vmax.f32 %v74, 0.0
  %v80 = vld [vmem:[%s1] sm:$0xff]
  %v82 = vsel %vm23, %v80, 0
  %84 = vmatpush.msra.mxu0 0.0
  %85 = vmatpush.msra.mxu0 0.0
  %86 = vmatpush.msra.mxu0 0.0
  %87 = vmatpush.msra.mxu0 0.0
  %88 = vmatpush.msra.mxu0 0.0
  %89 = vmatpush.msra.mxu0 0.0
  %90 = vmatpush.msra.mxu0 0.0
  %91 = vmatpush.msra.mxu0 0.0
  %92 = vmatpush.msra.mxu0 0.0
  %93 = vmatpush.msra.mxu0 0.0
  %94 = vmatpush.msra.mxu0 0.0
  %95 = vmatpush.msra.mxu0 0.0
  %96 = vmatpush.msra.mxu0 0.0
  %97 = vmatpush.msra.mxu0 0.0
  %98 = vmatpush.msra.mxu0 %v79
  %99 = vmatpush.msra.mxu0 %v77
  %100 = vmatmul.f32.gmra.mxu0 %v82
  %v101 = vpop.f32.mrf.mxu0
  %v102 = vadd.f32 0.0, %v101
  %103 = vdwg.mxu0
  %v104 = vadd.f32 %v76, %v102
  %v105 = vld [vmem:[%s3] sm:$0xff]
  %v106 = vld [vmem:[%s3 + $0x8] sm:$0xff]
  %v107 = vld [vmem:[%s3 + $0x10] sm:$0xff]
  %v108 = vld [vmem:[%s3 + $0x18] sm:$0xff]
  %v109 = vld [vmem:[%s3 + $0x20] sm:$0xff]
  %v110 = vld [vmem:[%s3 + $0x28] sm:$0xff]
  %v111 = vld [vmem:[%s3 + $0x30] sm:$0xff]
  %v112 = vld [vmem:[%s3 + $0x38] sm:$0xff]
  %v113 = vld [vmem:[%s3 + $0x40] sm:$0xff]
  %v114 = vld [vmem:[%s3 + $0x48] sm:$0xff]
  %v115 = vld [vmem:[%s3 + $0x50] sm:$0xff]
  %v116 = vld [vmem:[%s3 + $0x58] sm:$0xff]
  %v117 = vld [vmem:[%s3 + $0x60] sm:$0xff]
  %v118 = vld [vmem:[%s3 + $0x68] sm:$0xff]
  %v119 = vld [vmem:[%s3 + $0x70] sm:$0xff]
  %v120 = vld [vmem:[%s3 + $0x78] sm:$0xff]
  %121 = vmatpush.msra.mxu0 %v120
  %122 = vmatpush.msra.mxu0 %v119
  %123 = vmatpush.msra.mxu0 %v118
  %124 = vmatpush.msra.mxu0 %v117
  %125 = vmatpush.msra.mxu0 %v116
  %126 = vmatpush.msra.mxu0 %v115
  %127 = vmatpush.msra.mxu0 %v114
  %128 = vmatpush.msra.mxu0 %v113
  %129 = vmatpush.msra.mxu0 %v112
  %130 = vmatpush.msra.mxu0 %v111
  %131 = vmatpush.msra.mxu0 %v110
  %132 = vmatpush.msra.mxu0 %v109
  %133 = vmatpush.msra.mxu0 %v108
  %134 = vmatpush.msra.mxu0 %v107
  %135 = vmatpush.msra.mxu0 %v106
  %136 = vmatpush.msra.mxu0 %v105
  %137 = vmatmul.f32.gmra.mxu0 %v104
  %v138 = vpop.f32.mrf.mxu0
  %v139 = vadd.f32 0.0, %v138
  %140 = vdwg.mxu0
  %141 = vst [vmem:[%s4] sm:$0xff] %v139
  %142 = vst [vmem:[%s4 + $0x8] sm:$0xff] %v78
  // Predicated region
  $region18: #{_forward_impl.1} parent=0 // pred_check
    _
  $region19: #{_forward_impl.1} parent=0 // pred_check_branch
    %144 = sbr.rel (0) target = $region21
  $region20: #{_forward_impl.1} parent=0 // pred_region
    _
  $region21: #{_forward_impl.1} parent=0 // pred_fallthru
    _
  // Predicated region
  $region22: #{_forward_impl.1} parent=0 // pred_check
    _
  $region23: #{_forward_impl.1} parent=0 // pred_check_branch
    %146 = sbr.rel (0) target = $region25
  $region24: #{_forward_impl.1} parent=0 // pred_region
    _
  $region25: #{_forward_impl.1} parent=0 // pred_fallthru
    _

</llo_original>
